<compile_context>
chip_gen: v5e
topology: v5e:2x2
jax: 0.10.0
libtpu: 0.0.40
codegen_flags: <defaults>
</compile_context>

<pallas_src>
import functools
import math

import jax
import jax.numpy as jnp
from jax import lax
from jax.experimental import pallas as pl
from jax.experimental.pallas import tpu as pltpu


def _round_up(v, m):
    return ((v + m - 1) // m) * m


def _focal_factor(one_minus_pt, gamma):
    """(1 - pt)^gamma specialized for static gamma."""
    g = float(gamma)
    if g.is_integer() and 1.0 <= g <= 16.0:
        r = one_minus_pt
        for _ in range(int(g) - 1):
            r = r * one_minus_pt
        return r
    # non-integer gamma: guard tiny negative (1 - pt) rounding -> NaN from pow
    return jnp.power(jnp.maximum(one_minus_pt, 0.0), g)


def _focal_loss_kernel(x_ref, t_ref, a_ref, loss_ref, cnt_ref, *, gamma, valid_len):
    """One (classes x TILE_L) tile: log-softmax over classes (sublanes),
    one-hot gather, focal weighting, -1 / tail masking, lane-wise accumulate."""
    l_blk = pl.program_id(1)

    @pl.when(l_blk == 0)
    def _():
        loss_ref[...] = jnp.zeros_like(loss_ref)
        cnt_ref[...] = jnp.zeros_like(cnt_ref)

    x = x_ref[...].astype(jnp.float32)          # (C, TILE_L)  classes on sublanes
    t = t_ref[...]                              # (1, TILE_L)  int32, -1 == missing
    c, tile_l = x.shape

    # mask: real labels AND inside the (un-padded) row range of this batch item
    lane = lax.broadcasted_iota(jnp.int32, (1, tile_l), 1)
    in_bounds = (l_blk * tile_l + lane) < valid_len
    valid = jnp.logical_and(t != -1, in_bounds)
    t_safe = jnp.where(valid, t, 0)

    # numerically stable log-softmax along the class (sublane) axis
    m = jnp.max(x, axis=0, keepdims=True)                           # (1, TILE_L)
    z = x - m
    lse = jnp.log(jnp.sum(jnp.exp(z), axis=0, keepdims=True))       # (1, TILE_L)
    logp = z - lse                                                  # (C, TILE_L)

    cls = lax.broadcasted_iota(jnp.int32, (c, tile_l), 0)
    onehot = cls == t_safe                                          # (C, TILE_L)

    # gather logpt = logp[target, col] and at = alpha[target] via masked reduces
    logpt = jnp.sum(jnp.where(onehot, logp, 0.0), axis=0, keepdims=True)  # (1, TILE_L)
    alpha = a_ref[...].astype(jnp.float32)                          # (C, 1)
    at = jnp.sum(jnp.where(onehot, alpha, 0.0), axis=0, keepdims=True)    # (1, TILE_L)

    pt = jnp.exp(logpt)
    weighted = logpt * at
    if float(gamma) != 0.0:
        weighted = _focal_factor(1.0 - pt, gamma) * weighted
    loss = -weighted

    loss_ref[...] += jnp.where(valid, loss, 0.0)
    cnt_ref[...] += valid.astype(jnp.float32)


def focal_loss(x, target, gamma=0.0, alpha=None, size_average=True, max_tile_l=8192):
    """Pallas focal loss matching FocalLoss.forward semantics."""
    x = jnp.asarray(x)
    if x.dtype not in (jnp.float32, jnp.bfloat16):
        x = x.astype(jnp.float32)

    if x.ndim > 2:
        # NCHW-style input: keep the native (N, C, spatial) layout -> no transpose.
        b, c0 = x.shape[0], x.shape[1]
        spatial = int(math.prod(x.shape[2:]))
        x3 = x.reshape(b, c0, spatial)
    else:
        # (rows, C) input: single XLA transpose puts classes on the sublane axis.
        # TODO(synk): a second kernel variant (C padded to 128, rows on lanes)
        # would avoid this extra HBM pass for plain 2-D inputs.
        rows, c0 = x.shape
        x3 = x.T.reshape(1, c0, rows)
        b, spatial = 1, rows

    t = jnp.asarray(target).astype(jnp.int32).reshape(b, 1, spatial)

    # per-class alpha column (ones == no alpha weighting)
    if alpha is None:
        a = jnp.ones((c0, 1), jnp.float32)
    else:
        if isinstance(alpha, (float, int)):
            a_vals = jnp.asarray([alpha, 1.0 - alpha], jnp.float32)
        else:
            a_vals = jnp.asarray(alpha, jnp.float32).reshape(-1)
        a_vals = a_vals[:c0]
        a = jnp.zeros((c0, 1), jnp.float32).at[: a_vals.shape[0], 0].set(a_vals)

    # lane-dense tile along the row/spatial axis; keep the double-buffered
    # logits stream within a conservative VMEM budget (v7x: 64 MiB physical).
    cap_by_vmem = max(128, (8 * 1024 * 1024) // (2 * c0 * 4))
    tile_l = min(max_tile_l, cap_by_vmem, _round_up(spatial, 128))
    tile_l = max(128, (tile_l // 128) * 128)
    num_l = pl.cdiv(spatial, tile_l)

    kernel = functools.partial(
        _focal_loss_kernel, gamma=float(gamma), valid_len=spatial)

    loss_part, cnt_part = pl.pallas_call(
        kernel,
        out_shape=(
            jax.ShapeDtypeStruct((b, 1, tile_l), jnp.float32),
            jax.ShapeDtypeStruct((b, 1, tile_l), jnp.float32),
        ),
        grid_spec=pltpu.PrefetchScalarGridSpec(
            num_scalar_prefetch=0,
            grid=(b, num_l),
            in_specs=[
                pl.BlockSpec((None, c0, tile_l), lambda n, l: (n, 0, l)),  # logits
                pl.BlockSpec((None, 1, tile_l), lambda n, l: (n, 0, l)),   # targets
                pl.BlockSpec((c0, 1), lambda n, l: (0, 0)),                # alpha col
            ],
            out_specs=(
                pl.BlockSpec((None, 1, tile_l), lambda n, l: (n, 0, 0)),   # loss partials
                pl.BlockSpec((None, 1, tile_l), lambda n, l: (n, 0, 0)),   # valid counts
            ),
        ),
        compiler_params=pltpu.CompilerParams(
            dimension_semantics=("parallel", "arbitrary")),
    )(x3, t, a)

    loss_sum = jnp.sum(loss_part)
    if size_average:
        return loss_sum / jnp.sum(cnt_part)
    return loss_sum


def focal_loss_ref(x, target, gamma=0.0, alpha=None, size_average=True):
    """Pure-JAX reference mirroring the PyTorch module."""
    x = jnp.asarray(x, jnp.float32)
    if x.ndim > 2:
        n0, c0 = x.shape[0], x.shape[1]
        x = jnp.transpose(x.reshape(n0, c0, -1), (0, 2, 1)).reshape(-1, c0)
    n, c = x.shape
    t = jnp.asarray(target).reshape(-1).astype(jnp.int32)
    valid = t != -1
    t = jnp.where(valid, t, 0)
    logp = jax.nn.log_softmax(x, axis=1)
    logpt = jnp.take_along_axis(logp, t[:, None], axis=1)[:, 0]
    pt = jnp.exp(logpt)
    if alpha is not None:
        if isinstance(alpha, (float, int)):
            a = jnp.asarray([alpha, 1.0 - alpha], jnp.float32)
        else:
            a = jnp.asarray(alpha, jnp.float32)
        logpt = logpt * a[t]
    loss = -1.0 * (1.0 - pt) ** gamma * logpt
    loss = jnp.where(valid, loss, 0.0)
    if size_average:
        return jnp.sum(loss) / jnp.sum(valid.astype(jnp.float32))
    return jnp.sum(loss)


if __name__ == "__main__":
    key = jax.random.PRNGKey(0)
    kx, kt, km, kx2, kt2, km2 = jax.random.split(key, 6)

    # --- test 1: NCHW logits, per-class alpha list, integer gamma ---
    N, C, H, W = 2, 4, 16, 16
    x = jax.random.normal(kx, (N, C, H, W), jnp.float32)
    target = jax.random.randint(kt, (N, H, W), 0, C).astype(jnp.int32)
    miss = jax.random.bernoulli(km, 0.1, (N, H, W))
    target = jnp.where(miss, -1, target)

    gamma = 2.0
    alpha = [0.1, 0.2, 0.3, 0.4]

    out = focal_loss(x, target, gamma=gamma, alpha=alpha, size_average=True)
    out = jax.block_until_ready(out)
    ref = focal_loss_ref(x, target, gamma=gamma, alpha=alpha, size_average=True)
    assert jnp.allclose(out, ref, rtol=1e-5, atol=1e-5), (out, ref)

    # --- test 2: plain (rows, C) logits, scalar alpha, gamma == 0 ---
    R, C2 = 64, 2
    x2 = jax.random.normal(kx2, (R, C2), jnp.float32)
    t2 = jax.random.randint(kt2, (R,), 0, C2).astype(jnp.int32)
    t2 = jnp.where(jax.random.bernoulli(km2, 0.15, (R,)), -1, t2)

    out2 = focal_loss(x2, t2, gamma=0.0, alpha=0.3, size_average=True)
    out2 = jax.block_until_ready(out2)
    ref2 = focal_loss_ref(x2, t2, gamma=0.0, alpha=0.3, size_average=True)
    assert jnp.allclose(out2, ref2, rtol=1e-5, atol=1e-5), (out2, ref2)

    print("KERNEL_OK")
</pallas_src>

<mosaic_0001>
module attributes {stable_mosaic.version = 11 : i64} {
  func.func @_focal_loss_kernel(%arg0: i32, %arg1: i32, %arg2: memref<1x4x256xf32, #tpu.memory_space<vmem>>, %arg3: memref<1x1x256xi32, #tpu.memory_space<vmem>>, %arg4: memref<4x1xf32, #tpu.memory_space<vmem>>, %arg5: memref<1x1x256xf32, #tpu.memory_space<vmem>>, %arg6: memref<1x1x256xf32, #tpu.memory_space<vmem>>) attributes {dimension_semantics = [#tpu.dimension_semantics<parallel>, #tpu.dimension_semantics<arbitrary>], iteration_bounds = array<i64: 2, 1>, scalar_prefetch = 0 : i64, scratch_operands = 0 : i64, tpu.core_type = #tpu.core_type<tc>, window_params = [{transform_indices = @transform_0, window_bounds = array<i64: 1, 4, 256>}, {transform_indices = @transform_1, window_bounds = array<i64: 1, 1, 256>}, {pipeline_mode = #tpu.pipeline_mode<synchronous>, transform_indices = @transform_2, window_bounds = array<i64: 4, 1>}, {transform_indices = @transform_3, window_bounds = array<i64: 1, 1, 256>}, {transform_indices = @transform_4, window_bounds = array<i64: 1, 1, 256>}]} {
    %c0_i32 = arith.constant 0 : i32
    %0 = arith.cmpi eq, %arg1, %c0_i32 : i32
    %1 = arith.extui %0 : i1 to i32
    %c0_i32_0 = arith.constant 0 : i32
    %2 = arith.cmpi ne, %1, %c0_i32_0 : i32
    scf.if %2 {
      %cst_30 = arith.constant 0.000000e+00 : f32
      %66 = vector.broadcast %cst_30 : f32 to vector<1x256xf32>
      %c0_31 = arith.constant 0 : index
      %c0_32 = arith.constant 0 : index
      %c0_33 = arith.constant 0 : index
      %67 = vector.load %arg5[%c0_31, %c0_32, %c0_33] : memref<1x1x256xf32, #tpu.memory_space<vmem>>, vector<1x1x256xf32>
      %68 = vector.shape_cast %67 : vector<1x1x256xf32> to vector<1x256xf32>
      %69 = vector.shape_cast %66 : vector<1x256xf32> to vector<1x1x256xf32>
      tpu.vector_store %arg5[%c0_31, %c0_32, %c0_33], %69 {strides = array<i32>} : memref<1x1x256xf32, #tpu.memory_space<vmem>>, vector<1x1x256xf32>,
      %cst_34 = arith.constant 0.000000e+00 : f32
      %70 = vector.broadcast %cst_34 : f32 to vector<1x256xf32>
      %c0_35 = arith.constant 0 : index
      %c0_36 = arith.constant 0 : index
      %c0_37 = arith.constant 0 : index
      %71 = vector.load %arg6[%c0_35, %c0_36, %c0_37] : memref<1x1x256xf32, #tpu.memory_space<vmem>>, vector<1x1x256xf32>
      %72 = vector.shape_cast %71 : vector<1x1x256xf32> to vector<1x256xf32>
      %73 = vector.shape_cast %70 : vector<1x256xf32> to vector<1x1x256xf32>
      tpu.vector_store %arg6[%c0_35, %c0_36, %c0_37], %73 {strides = array<i32>} : memref<1x1x256xf32, #tpu.memory_space<vmem>>, vector<1x1x256xf32>,
    } else {
    }
    %c0 = arith.constant 0 : index
    %c0_1 = arith.constant 0 : index
    %c0_2 = arith.constant 0 : index
    %3 = vector.load %arg2[%c0, %c0_1, %c0_2] : memref<1x4x256xf32, #tpu.memory_space<vmem>>, vector<1x4x256xf32>
    %4 = vector.shape_cast %3 : vector<1x4x256xf32> to vector<4x256xf32>
    %c0_3 = arith.constant 0 : index
    %c0_4 = arith.constant 0 : index
    %c0_5 = arith.constant 0 : index
    %5 = vector.load %arg3[%c0_3, %c0_4, %c0_5] : memref<1x1x256xi32, #tpu.memory_space<vmem>>, vector<1x1x256xi32>
    %6 = vector.shape_cast %5 : vector<1x1x256xi32> to vector<1x256xi32>
    %7 = tpu.iota {dimensions = array<i32: 1>} : vector<1x256xi32>
    %c256_i32 = arith.constant 256 : i32
    %8 = arith.muli %arg1, %c256_i32 : i32
    %9 = vector.broadcast %8 : i32 to vector<1x256xi32>
    %10 = arith.addi %9, %7 : vector<1x256xi32>
    %c256_i32_6 = arith.constant 256 : i32
    %11 = vector.broadcast %c256_i32_6 : i32 to vector<1x256xi32>
    %12 = arith.cmpi slt, %10, %11 : vector<1x256xi32>
    %c-1_i32 = arith.constant -1 : i32
    %13 = vector.broadcast %c-1_i32 : i32 to vector<1x256xi32>
    %14 = arith.cmpi ne, %6, %13 : vector<1x256xi32>
    %15 = arith.andi %14, %12 : vector<1x256xi1>
    %c0_i32_7 = arith.constant 0 : i32
    %16 = vector.broadcast %c0_i32_7 : i32 to vector<1x256xi32>
    %17 = arith.select %15, %6, %16 : vector<1x256xi1>, vector<1x256xi32>
    %cst = arith.constant dense<0xFF800000> : vector<256xf32>
    %18 = vector.multi_reduction <maximumf>, %4, %cst [0] : vector<4x256xf32> to vector<256xf32>
    %19 = vector.shape_cast %18 : vector<256xf32> to vector<1x256xf32>
    %20 = vector.broadcast %19 : vector<1x256xf32> to vector<4x256xf32>
    %21 = arith.subf %4, %20 : vector<4x256xf32>
    %22 = math.exp %21 : vector<4x256xf32>
    %cst_8 = arith.constant dense<0.000000e+00> : vector<256xf32>
    %23 = vector.multi_reduction <add>, %22, %cst_8 [0] : vector<4x256xf32> to vector<256xf32>
    %24 = vector.shape_cast %23 : vector<256xf32> to vector<1x256xf32>
    %25 = math.log %24 : vector<1x256xf32>
    %26 = vector.broadcast %25 : vector<1x256xf32> to vector<4x256xf32>
    %27 = arith.subf %21, %26 : vector<4x256xf32>
    %28 = tpu.iota {dimensions = array<i32: 0>} : vector<4x256xi32>
    %29 = vector.broadcast %17 : vector<1x256xi32> to vector<4x256xi32>
    %30 = arith.cmpi eq, %28, %29 : vector<4x256xi32>
    %cst_9 = arith.constant 0.000000e+00 : f32
    %31 = vector.broadcast %cst_9 : f32 to vector<4x256xf32>
    %32 = arith.select %30, %27, %31 : vector<4x256xi1>, vector<4x256xf32>
    %cst_10 = arith.constant dense<0.000000e+00> : vector<256xf32>
    %33 = vector.multi_reduction <add>, %32, %cst_10 [0] : vector<4x256xf32> to vector<256xf32>
    %34 = vector.shape_cast %33 : vector<256xf32> to vector<1x256xf32>
    %c0_11 = arith.constant 0 : index
    %c0_12 = arith.constant 0 : index
    %35 = vector.load %arg4[%c0_11, %c0_12] : memref<4x1xf32, #tpu.memory_space<vmem>>, vector<4x1xf32>
    %cst_13 = arith.constant 0.000000e+00 : f32
    %36 = vector.shape_cast %35 : vector<4x1xf32> to vector<4x1xf32>
    %37 = vector.broadcast %36 : vector<4x1xf32> to vector<4x256xf32>
    %38 = vector.broadcast %cst_13 : f32 to vector<4x256xf32>
    %39 = arith.select %30, %37, %38 : vector<4x256xi1>, vector<4x256xf32>
    %cst_14 = arith.constant dense<0.000000e+00> : vector<256xf32>
    %40 = vector.multi_reduction <add>, %39, %cst_14 [0] : vector<4x256xf32> to vector<256xf32>
    %41 = vector.shape_cast %40 : vector<256xf32> to vector<1x256xf32>
    %42 = math.exp %34 : vector<1x256xf32>
    %43 = arith.mulf %34, %41 : vector<1x256xf32>
    %cst_15 = arith.constant 1.000000e+00 : f32
    %44 = vector.broadcast %cst_15 : f32 to vector<1x256xf32>
    %45 = arith.subf %44, %42 : vector<1x256xf32>
    %46 = arith.mulf %45, %45 : vector<1x256xf32>
    %47 = arith.mulf %46, %43 : vector<1x256xf32>
    %cst_16 = arith.constant 0.000000e+00 : f32
    %48 = vector.broadcast %cst_16 : f32 to vector<1x256xf32>
    %49 = arith.subf %48, %47 : vector<1x256xf32>
    %c0_17 = arith.constant 0 : index
    %c0_18 = arith.constant 0 : index
    %c0_19 = arith.constant 0 : index
    %50 = vector.load %arg5[%c0_17, %c0_18, %c0_19] : memref<1x1x256xf32, #tpu.memory_space<vmem>>, vector<1x1x256xf32>
    %51 = vector.shape_cast %50 : vector<1x1x256xf32> to vector<1x256xf32>
    %cst_20 = arith.constant 0.000000e+00 : f32
    %52 = vector.broadcast %cst_20 : f32 to vector<1x256xf32>
    %53 = arith.select %15, %49, %52 : vector<1x256xi1>, vector<1x256xf32>
    %54 = arith.addf %51, %53 : vector<1x256xf32>
    %c0_21 = arith.constant 0 : index
    %c0_22 = arith.constant 0 : index
    %c0_23 = arith.constant 0 : index
    %55 = vector.load %arg5[%c0_21, %c0_22, %c0_23] : memref<1x1x256xf32, #tpu.memory_space<vmem>>, vector<1x1x256xf32>
    %56 = vector.shape_cast %55 : vector<1x1x256xf32> to vector<1x256xf32>
    %57 = vector.shape_cast %54 : vector<1x256xf32> to vector<1x1x256xf32>
    tpu.vector_store %arg5[%c0_21, %c0_22, %c0_23], %57 {strides = array<i32>} : memref<1x1x256xf32, #tpu.memory_space<vmem>>, vector<1x1x256xf32>,
    %c0_24 = arith.constant 0 : index
    %c0_25 = arith.constant 0 : index
    %c0_26 = arith.constant 0 : index
    %58 = vector.load %arg6[%c0_24, %c0_25, %c0_26] : memref<1x1x256xf32, #tpu.memory_space<vmem>>, vector<1x1x256xf32>
    %59 = vector.shape_cast %58 : vector<1x1x256xf32> to vector<1x256xf32>
    %60 = arith.extui %15 : vector<1x256xi1> to vector<1x256xi32>
    %61 = arith.sitofp %60 : vector<1x256xi32> to vector<1x256xf32>
    %62 = arith.addf %59, %61 : vector<1x256xf32>
    %c0_27 = arith.constant 0 : index
    %c0_28 = arith.constant 0 : index
    %c0_29 = arith.constant 0 : index
    %63 = vector.load %arg6[%c0_27, %c0_28, %c0_29] : memref<1x1x256xf32, #tpu.memory_space<vmem>>, vector<1x1x256xf32>
    %64 = vector.shape_cast %63 : vector<1x1x256xf32> to vector<1x256xf32>
    %65 = vector.shape_cast %62 : vector<1x256xf32> to vector<1x1x256xf32>
    tpu.vector_store %arg6[%c0_27, %c0_28, %c0_29], %65 {strides = array<i32>} : memref<1x1x256xf32, #tpu.memory_space<vmem>>, vector<1x1x256xf32>,
    return
  }
  func.func @transform_0(%arg0: i32, %arg1: i32) -> (i32, i32, i32) {
    %c0_i32 = arith.constant 0 : i32
    %c0_i32_0 = arith.constant 0 : i32
    return %arg0, %c0_i32, %arg1 : i32, i32, i32
  }
  func.func @transform_1(%arg0: i32, %arg1: i32) -> (i32, i32, i32) {
    %c0_i32 = arith.constant 0 : i32
    %c0_i32_0 = arith.constant 0 : i32
    return %arg0, %c0_i32, %arg1 : i32, i32, i32
  }
  func.func @transform_2(%arg0: i32, %arg1: i32) -> (i32, i32) {
    %c0_i32 = arith.constant 0 : i32
    %c0_i32_0 = arith.constant 0 : i32
    %c0_i32_1 = arith.constant 0 : i32
    return %c0_i32, %c0_i32_0 : i32, i32
  }
  func.func @transform_3(%arg0: i32, %arg1: i32) -> (i32, i32, i32) {
    %c0_i32 = arith.constant 0 : i32
    %c0_i32_0 = arith.constant 0 : i32
    %c0_i32_1 = arith.constant 0 : i32
    return %arg0, %c0_i32, %c0_i32_0 : i32, i32, i32
  }
  func.func @transform_4(%arg0: i32, %arg1: i32) -> (i32, i32, i32) {
    %c0_i32 = arith.constant 0 : i32
    %c0_i32_0 = arith.constant 0 : i32
    %c0_i32_1 = arith.constant 0 : i32
    return %arg0, %c0_i32, %c0_i32_0 : i32, i32, i32
  }
}

</mosaic_0001>

<llo_original>
// kernel: tpu_custom_call.1
$region0: #{tpu_custom_call.1}
  #allocation0 [shape = 'u32[]', space=smem, size = 0x4, offset = 0x4, fixed_abs, tag = 'smem constant byte address 0x4 - core index']
  #allocation1 [shape = 'u32[72,128]{1,0:T(1,128)}', space=vmem, size = 0x9000, scoped, tag = 'internal scratch']
  %s0 = inlined_call_operand.hbm [shape: f32[2,4,256], index: 0, kind: input, shape index: {}]
  %s1 = inlined_call_operand.vmem [shape: s32[2,1,256], index: 1, kind: input, shape index: {}]
  %s2 = inlined_call_operand.vmem [shape: f32[4,1], index: 2, kind: input, shape index: {}]
  %s3 = inlined_call_operand.hbm [shape: f32[2,1,256], index: 3, kind: output, shape index: {0}]
  %s4 = inlined_call_operand.hbm [shape: f32[2,1,256], index: 4, kind: output, shape index: {1}]
  %5 = xla_tuple %s3, %s4
  %s6 = sld [smem:[#allocation0]]
  $region61: #{tpu_custom_call.1} parent=0
    _
  %s8 = ssub.s32 1, %s6
  %s9 = scalar_select 0, %s8, %s6
  $region1: #{tpu_custom_call.1} parent=0
    #allocation2 [shape = 'u8[8192]{0}', space=vmem, size = 0x2000, scoped, tag = 'input window, operand 0']
    #allocation3 [shape = 's32[2]{0}', space=sflag, size = 0x8, scoped, tag = 'scoped memory for tpu_custom_call.1']
    #allocation4 [shape = 's32[2]{0}', space=sflag, size = 0x8, scoped, tag = 'scoped memory for tpu_custom_call.1']
    #allocation5 [shape = 'u8[2048]{0}', space=vmem, size = 0x800, scoped, tag = 'output window, operand 0']
    #allocation6 [shape = 'u8[2048]{0}', space=vmem, size = 0x800, scoped, tag = 'output window, operand 1']
    #allocation7 [shape = 's32[2]{0}', space=sflag, size = 0x8, scoped, tag = 'scoped memory for tpu_custom_call.1']
    %10 = vsyncpa [#allocation3], 0
    %s11 = scalar_lea.sflag [#allocation3], 1
    %12 = vsyncpa %s11, 0
    %13 = vsyncpa [#allocation4], 0
    %s14 = scalar_lea.sflag [#allocation4], 1
    %15 = vsyncpa %s14, 0
    %16 = vsyncpa [#allocation7], 0
    %s17 = scalar_lea.sflag [#allocation7], 1
    %18 = vsyncpa %s17, 0
    loop: start=0, step=1, limit=4
    $region2: #{tpu_custom_call.1} parent=1 // loop_pre_header
      _
    $region3: #{tpu_custom_call.1} parent=1 // loop_header
      %s20 = sphi 0, %s24
      %p21 = scmp.ge.s32.totalorder %s20, 4
      %s27 = sphi 0, %s39
      %s28 = sphi 0, %s35
      %s29 = sphi 0, %s27
      %s30 = sphi 0, %s28
      %s31 = sphi 0, %s29
      %s32 = sphi 0, %s30
      %s44 = sphi 0, %s46
      %s47 = sphi 0, %s44
      %s48 = sphi 0, %s47
      %s64 = sphi 0, %s48
      %s72 = sphi 0, %s74
      %s75 = sphi 0, %s72
      %s76 = sphi 0, %s75
      %s92 = sphi 0, %s76
      %s96 = sphi 0, %s96
      %s98 = sphi 0, %s96
      %s99 = sphi 0, %s98
      %s113 = sphi 0, %s99
      %s119 = sphi 0, %s121
      %s122 = sphi 0, %s119
      %s123 = sphi 0, %s122
      %s139 = sphi 0, %s123
      %s145 = sphi 0, %s147
      %s148 = sphi 0, %s145
      %s149 = sphi 0, %s148
      %s165 = sphi 0, %s149
    $region4: #{tpu_custom_call.1} parent=1 // loop_header_branch
      %23 = sbr.rel (%p21) target = $region8
    $region5: #{tpu_custom_call.1} parent=1 // loop_body
      %s25 = ssub.s32 %s20, 1
      %s26 = ssub.s32 %s20, 2
      %s33 = sadd.s32 1, %s28
      %p34 = scmp.ge.s32.totalorder %s33, 1
      %s35 = scalar_select %p34, 0, %s33
      %s36 = sadd.s32 1, %s27
      %s37 = scalar_select %p34, %s36, %s27
      %p38 = scmp.ge.s32.totalorder %s37, 2
      %s39 = scalar_select %p38, 0, %s37
      %s40 = ssub.s32 %s27, %s39
      %s41 = ssub.s32 %s28, %s35
      %s42 = sor.u32 %s40, %s41
      %p43 = scmp.eq.s32.totalorder %s42, 0
      %s45 = sadd.s32 %s44, 1
      %s46 = scalar_select %p43, %s44, %s45
      %p49 = pneg %p43
      %p50 = scmp.eq.s32.totalorder %s20, 1
      %p51 = por %p49, %p50
      %p52 = scmp.ne.s32.totalorder %s44, %s47
      %p53 = scmp.eq.s32.totalorder %s20, 0
      %p54 = por %p52, %p53
      %p55 = scmp.ne.s32.totalorder %s44, %s47
      %p56 = scmp.eq.s32.totalorder %s25, 1
      %p57 = por %p55, %p56
      %p58 = scmp.ne.s32.totalorder %s47, %s48
      %p59 = scmp.eq.s32.totalorder %s25, 0
      %p60 = por %p58, %p59
      %p61 = scmp.ne.s32.totalorder %s47, %s48
      %p62 = scmp.eq.s32.totalorder %s26, 1
      %p63 = por %p61, %p62
      %p65 = scmp.ne.s32.totalorder %s48, %s64
      %p66 = scmp.eq.s32.totalorder %s26, 0
      %p67 = por %p65, %p66
      %s68 = ssub.s32 %s27, %s39
      %s69 = ssub.s32 %s28, %s35
      %s70 = sor.u32 %s68, %s69
      %p71 = scmp.eq.s32.totalorder %s70, 0
      %s73 = sadd.s32 %s72, 1
      %s74 = scalar_select %p71, %s72, %s73
      %p77 = pneg %p71
      %p78 = scmp.eq.s32.totalorder %s20, 1
      %p79 = por %p77, %p78
      %p80 = scmp.ne.s32.totalorder %s72, %s75
      %p81 = scmp.eq.s32.totalorder %s20, 0
      %p82 = por %p80, %p81
      %p83 = scmp.ne.s32.totalorder %s72, %s75
      %p84 = scmp.eq.s32.totalorder %s25, 1
      %p85 = por %p83, %p84
      %p86 = scmp.ne.s32.totalorder %s75, %s76
      %p87 = scmp.eq.s32.totalorder %s25, 0
      %p88 = por %p86, %p87
      %p89 = scmp.ne.s32.totalorder %s75, %s76
      %p90 = scmp.eq.s32.totalorder %s26, 1
      %p91 = por %p89, %p90
      %p93 = scmp.ne.s32.totalorder %s76, %s92
      %p94 = scmp.eq.s32.totalorder %s26, 0
      %p95 = por %p93, %p94
      %s97 = sadd.s32 %s96, 1
      %p100 = scmp.eq.s32.totalorder %s20, 1
      %p101 = scmp.ne.s32.totalorder %s96, %s98
      %p102 = scmp.eq.s32.totalorder %s20, 0
      %p103 = por %p101, %p102
      %p104 = scmp.ne.s32.totalorder %s96, %s98
      %p105 = scmp.eq.s32.totalorder %s25, 1
      %p106 = por %p104, %p105
      %p107 = scmp.ne.s32.totalorder %s98, %s99
      %p108 = scmp.eq.s32.totalorder %s25, 0
      %p109 = por %p107, %p108
      %p110 = scmp.ne.s32.totalorder %s98, %s99
      %p111 = scmp.eq.s32.totalorder %s26, 1
      %p112 = por %p110, %p111
      %p114 = scmp.ne.s32.totalorder %s99, %s113
      %p115 = scmp.eq.s32.totalorder %s26, 0
      %p116 = por %p114, %p115
      %s117 = ssub.s32 %s27, %s39
      %p118 = scmp.eq.s32.totalorder %s117, 0
      %s120 = sadd.s32 %s119, 1
      %s121 = scalar_select %p118, %s119, %s120
      %p124 = pneg %p118
      %p125 = scmp.eq.s32.totalorder %s20, 1
      %p126 = por %p124, %p125
      %p127 = scmp.ne.s32.totalorder %s119, %s122
      %p128 = scmp.eq.s32.totalorder %s20, 0
      %p129 = por %p127, %p128
      %p130 = scmp.ne.s32.totalorder %s119, %s122
      %p131 = scmp.eq.s32.totalorder %s25, 1
      %p132 = por %p130, %p131
      %p133 = scmp.ne.s32.totalorder %s122, %s123
      %p134 = scmp.eq.s32.totalorder %s25, 0
      %p135 = por %p133, %p134
      %p136 = scmp.ne.s32.totalorder %s122, %s123
      %p137 = scmp.eq.s32.totalorder %s26, 1
      %p138 = por %p136, %p137
      %p140 = scmp.ne.s32.totalorder %s123, %s139
      %p141 = scmp.eq.s32.totalorder %s26, 0
      %p142 = por %p140, %p141
      %s143 = ssub.s32 %s27, %s39
      %p144 = scmp.eq.s32.totalorder %s143, 0
      %s146 = sadd.s32 %s145, 1
      %s147 = scalar_select %p144, %s145, %s146
      %p150 = pneg %p144
      %p151 = scmp.eq.s32.totalorder %s20, 1
      %p152 = por %p150, %p151
      %p153 = scmp.ne.s32.totalorder %s145, %s148
      %p154 = scmp.eq.s32.totalorder %s20, 0
      %p155 = por %p153, %p154
      %p156 = scmp.ne.s32.totalorder %s145, %s148
      %p157 = scmp.eq.s32.totalorder %s25, 1
      %p158 = por %p156, %p157
      %p159 = scmp.ne.s32.totalorder %s148, %s149
      %p160 = scmp.eq.s32.totalorder %s25, 0
      %p161 = por %p159, %p160
      %p162 = scmp.ne.s32.totalorder %s148, %s149
      %p163 = scmp.eq.s32.totalorder %s26, 1
      %p164 = por %p162, %p163
      %p166 = scmp.ne.s32.totalorder %s149, %s165
      %p167 = scmp.eq.s32.totalorder %s26, 0
      %p168 = por %p166, %p167
      %p169 = scmp.le.s32.totalorder 1, %s20
      %p170 = scmp.lt.s32.totalorder %s20, 3
      %p171 = pnand %p169, %p170
      %p172 = pneg %p171
      // Predicated region
      $region9: #{tpu_custom_call.1} parent=5 // pred_check
        _
      $region10: #{tpu_custom_call.1} parent=5 // pred_check_branch
        %174 = sbr.rel (%p171) target = $region12
      $region11: #{tpu_custom_call.1} parent=5 // pred_region
        %s175 = ssub.s32 %s20, 1
        // Predicated region
        $region13: #{tpu_custom_call.1} parent=11 // pred_check
          %p176 = pneg %p109
        $region14: #{tpu_custom_call.1} parent=11 // pred_check_branch
          %178 = sbr.rel (%p176) target = $region16
        $region15: #{tpu_custom_call.1} parent=11 // pred_region
          _
        $region16: #{tpu_custom_call.1} parent=11 // pred_fallthru
          _
      $region12: #{tpu_custom_call.1} parent=5 // pred_fallthru
        _
      %p179 = scmp.lt.s32.totalorder %s20, 2
      // Predicated region
      $region17: #{tpu_custom_call.1} parent=5 // pred_check
        %p180 = pneg %p179
      $region18: #{tpu_custom_call.1} parent=5 // pred_check_branch
        %182 = sbr.rel (%p180) target = $region20
      $region19: #{tpu_custom_call.1} parent=5 // pred_region
        // Predicated region
        $region21: #{tpu_custom_call.1} parent=19 // pred_check
          %p183 = pneg %p54
        $region22: #{tpu_custom_call.1} parent=19 // pred_check_branch
          %185 = sbr.rel (%p183) target = $region24
        $region23: #{tpu_custom_call.1} parent=19 // pred_region
          %s186 = sand.u32 %s44, 1
          %s187 = scalar_lea.sflag [#allocation3], %s186
          %s188 = sand.u32 %s44, 1
          %s189 = smul.addr %s188, 8
          %s190 = scalar_lea.vmem [#allocation2], %s189
          %s191 = smul.u32 2, %s28
          %193 = vsyncadd %s187, 0
          %s194 = smul.addr %s27, 2
          %s195 = sadd.s32 %s191, %s194
          %s196 = smul.addr %s195, 4
          %s197 = scalar_lea.hbm %s0, %s196
          %s199 = sshll.u32 %s197, 4
          %s200 = int_to_ptr.hbm [resolvable:$true] %s199
          %s201 = sshll.u32 %s190, 4
          %s202 = int_to_ptr.vmem [resolvable:$true] %s201
          %204 = dma.hbm_to_vmem [thread:$0]  %s200, 128, %s202, %s187
        $region24: #{tpu_custom_call.1} parent=19 // pred_fallthru
          _
        // Predicated region
        $region25: #{tpu_custom_call.1} parent=19 // pred_check
          %p205 = pneg %p82
        $region26: #{tpu_custom_call.1} parent=19 // pred_check_branch
          %207 = sbr.rel (%p205) target = $region28
        $region27: #{tpu_custom_call.1} parent=19 // pred_region
          %s208 = smul.u32 2, %s28
          %p209 = scmp.lt.s32.totalorder %s27, 1
          %s210 = scalar_select %p209, %s27, 1
          %p211 = scmp.lt.s32.totalorder %s208, 1
          %s212 = scalar_select %p211, %s208, 1
          %s213 = smul.addr %s210, 2
          %s214 = sadd.s32 %s212, %s213
          %s215 = scalar_lea.vmem %s1, %s214
          %s216 = smul.u32 2, %s28
        $region28: #{tpu_custom_call.1} parent=19 // pred_fallthru
          _
      $region20: #{tpu_custom_call.1} parent=5 // pred_fallthru
        _
      %p217 = scmp.le.s32.totalorder 1, %s20
      %p218 = scmp.lt.s32.totalorder %s20, 3
      %p219 = pnand %p217, %p218
      %p220 = pneg %p219
      // Predicated region
      $region29: #{tpu_custom_call.1} parent=5 // pred_check
        _
      $region30: #{tpu_custom_call.1} parent=5 // pred_check_branch
        %222 = sbr.rel (%p219) target = $region32
      $region31: #{tpu_custom_call.1} parent=5 // pred_region
        %s223 = ssub.s32 %s20, 1
        %s224 = sand.u32 %s47, 1
        %s225 = scalar_lea.sflag [#allocation3], %s224
        %s226 = sand.u32 %s47, 1
        %s227 = smul.addr %s226, 8
        %s228 = scalar_lea.vmem [#allocation2], %s227
        // Predicated region
        $region33: #{tpu_custom_call.1} parent=31 // pred_check
          %p229 = pneg %p60
        $region34: #{tpu_custom_call.1} parent=31 // pred_check_branch
          %231 = sbr.rel (%p229) target = $region36
        $region35: #{tpu_custom_call.1} parent=31 // pred_region
          %233 = dma.done %s225, 128
        $region36: #{tpu_custom_call.1} parent=31 // pred_fallthru
          _
        %s234 = sand.u32 %s47, 1
        %s235 = scalar_lea.sflag [#allocation3], %s234
        %s236 = sand.u32 %s47, 1
        %s237 = smul.addr %s236, 8
        %s238 = scalar_lea.vmem [#allocation2], %s237
        %p239 = pneg %p60
        %p240 = pneg %p57
        %s241 = smul.u32 2, %s30
        %p242 = scmp.lt.s32.totalorder %s29, 1
        %s243 = scalar_select %p242, %s29, 1
        %p244 = scmp.lt.s32.totalorder %s241, 1
        %s245 = scalar_select %p244, %s241, 1
        %s246 = smul.addr %s243, 2
        %s247 = sadd.s32 %s245, %s246
        %s248 = scalar_lea.vmem %s1, %s247
        %p249 = pneg %p88
        %p250 = pneg %p85
        %p251 = pneg %p109
        %p252 = pneg %p106
        %p253 = pneg %p135
        %p254 = pneg %p132
        %s255 = sand.u32 %s122, 1
        %s256 = scalar_lea.sflag [#allocation4], %s255
        %s257 = sand.u32 %s122, 1
        %s258 = smul.addr %s257, 2
        %s259 = scalar_lea.vmem [#allocation5], %s258
        %p260 = pneg %p161
        %p261 = pneg %p158
        %s262 = sand.u32 %s148, 1
        %s263 = scalar_lea.sflag [#allocation7], %s262
        %s264 = sand.u32 %s148, 1
        %s265 = smul.addr %s264, 2
        %s266 = scalar_lea.vmem [#allocation6], %s265
        %s267 = smul.u32 2, %s30
        %s268 = smul.u32 2, %s30
        %p269 = scmp.lt.s32.totalorder %s29, 1
        %s270 = scalar_select %p269, %s29, 1
        %p271 = scmp.lt.s32.totalorder %s268, 1
        %s272 = scalar_select %p271, %s268, 1
        %s273 = smul.addr %s270, 2
        %s274 = sadd.s32 %s272, %s273
        %s275 = scalar_lea.vmem %s1, %s274
        %s276 = smul.u32 2, %s30
        %p277 = scmp.eq.s32.totalorder %s30, 0
        // Predicated region
        $region37: #{tpu_custom_call.1} parent=31 // pred_check
          %p278 = pneg %p277
        $region38: #{tpu_custom_call.1} parent=31 // pred_check_branch
          %280 = sbr.rel (%p278) target = $region40
        $region39: #{tpu_custom_call.1} parent=31 // pred_region
          %v281 = vlaneseq
          %vm282 = vcmp.ge.s32.totalorder %v281, 0
          %vm283 = vcmp.lt.s32.totalorder %v281, 256
          %vm284 = vmand %vm282, %vm283
          %285 = vst.msk [vmem:[%s259] sm:$0x3] %vm284, 0.0
          %286 = vst.msk [vmem:[%s266] sm:$0x3] %vm284, 0.0
        $region40: #{tpu_custom_call.1} parent=31 // pred_fallthru
          _
        %v287 = vld [vmem:[%s228] sm:$0xff]
        %v288 = vld [vmem:[%s275] sm:$0x3]
        %v289 = vlaneseq
        %v290 = vand.u32 %v289, 127
        %v291 = vadd.s32 %v290, 128
        %s292 = smul.u32 %s30, 256
        %v293 = vstv %s292
        %v294 = vadd.s32 %v293, %v290
        %v295 = vadd.s32 %v293, %v291
        %vm296 = vcmp.lt.s32.totalorder %v294, 256
        %vm297 = vcmp.lt.s32.totalorder %v295, 256
        %vm298 = vcmp.ne.s32.totalorder %v288, 4294967295
        %v299 = vsel %vm296, 1, 0
        %v300 = vsel %vm297, 1, 0
        %v301 = vrot.slane %v300, 7
        %vm302 = vcmask 1040384
        %v303 = vsel %vm302, %v299, %v301
        %vm304 = vcmp.ne.s32.totalorder %v303, 0
        %vm305 = vmand %vm298, %vm304
        %v306 = vsel %vm305, %v288, 0
        %308 = vst [vmem:[#allocation1] ss:$2 sm:$0xff] %v287
        %v309 = vld.sshfl [vmem:[#allocation1] sm:$0xff pattern:$0x75316420]
        %v310 = vld.sshfl [vmem:[#allocation1 + $0x8] sm:$0xff pattern:$0x75316420]
        %vm313 = vcmask 1043456
        %v314 = vsel %vm313, %v309, -inf
        %v315 = vrot.slane %v314, 4
        %v316 = vmax.f32 %v314, %v315
        %v317 = vrot.slane %v316, 2
        %v318 = vmax.f32 %v316, %v317
        %v319 = vrot.slane %v318, 1
        %v320 = vmax.f32 %v318, %v319
        %v321 = vsel %vm313, %v310, -inf
        %v322 = vrot.slane %v321, 4
        %v323 = vmax.f32 %v321, %v322
        %v324 = vrot.slane %v323, 2
        %v325 = vmax.f32 %v323, %v324
        %v326 = vrot.slane %v325, 1
        %v327 = vmax.f32 %v325, %v326
        %v330 = vrot.slane %v327, 4
        %v331 = vsel %vm313, %v320, %v330
        %v333 = vsub.f32 %v287, %v331
        %v334 = vmul.f32 %v333, 1.442695
        %v335 = vpow.pop %v334
        %337 = vst [vmem:[#allocation1] ss:$2 sm:$0xff] %v335
        %v338 = vld.sshfl [vmem:[#allocation1] sm:$0xff pattern:$0x75316420]
        %v339 = vld.sshfl [vmem:[#allocation1 + $0x8] sm:$0xff pattern:$0x75316420]
        %v342 = vsel %vm313, %v338, 0.0
        %v343 = vrot.slane %v342, 4
        %v344 = vadd.f32 %v342, %v343
        %v345 = vrot.slane %v344, 2
        %v346 = vadd.f32 %v344, %v345
        %v347 = vrot.slane %v346, 1
        %v348 = vadd.f32 %v346, %v347
        %v349 = vsel %vm313, %v339, 0.0
        %v350 = vrot.slane %v349, 4
        %v351 = vadd.f32 %v349, %v350
        %v352 = vrot.slane %v351, 2
        %v353 = vadd.f32 %v351, %v352
        %v354 = vrot.slane %v353, 1
        %v355 = vadd.f32 %v353, %v354
        %v356 = vlog2.pop %v348
        %v357 = vmul.f32 %v356, 0.6931472
        %v358 = vlog2.pop %v355
        %v359 = vmul.f32 %v358, 0.6931472
        %v362 = vrot.slane %v359, 4
        %v363 = vsel %vm313, %v357, %v362
        %v365 = vsub.f32 %v333, %v363
        %v366 = vlaneseq
        %v367 = vshrl.u32 %v366, 7
        %v368 = vperm.slane %v306, 0
        %v369 = vperm.slane %v306, 1
        %vm370 = vcmp.eq.s32.totalorder %v367, %v368
        %vm371 = vcmp.eq.s32.totalorder %v367, %v369
        %373 = vst [vmem:[#allocation1] ss:$2 sm:$0xff] %v365
        %v374 = vld.sshfl [vmem:[#allocation1] sm:$0xff pattern:$0x75316420]
        %v375 = vld.sshfl [vmem:[#allocation1 + $0x8] sm:$0xff pattern:$0x75316420]
        %v378 = vsel %vm370, %v374, 0.0
        %v379 = vsel %vm371, %v375, 0.0
        %v380 = vsel %vm313, %v378, 0.0
        %v381 = vrot.slane %v380, 4
        %v382 = vadd.f32 %v380, %v381
        %v383 = vrot.slane %v382, 2
        %v384 = vadd.f32 %v382, %v383
        %v385 = vrot.slane %v384, 1
        %v386 = vadd.f32 %v384, %v385
        %v387 = vsel %vm313, %v379, 0.0
        %v388 = vrot.slane %v387, 4
        %v389 = vadd.f32 %v387, %v388
        %v390 = vrot.slane %v389, 2
        %v391 = vadd.f32 %v389, %v390
        %v392 = vrot.slane %v391, 1
        %v393 = vadd.f32 %v391, %v392
        %v394 = vld [vmem:[%s2] sm:$0xf]
        %396 = vset.pattern.permute.xlu0 0
        %397 = vperm.xlu0 %396, %v394
        %v398 = vpop.permute.xlu0 %397
        %v400 = vsel %vm370, %v398, 0.0
        %v401 = vsel %vm371, %v398, 0.0
        %v402 = vsel %vm313, %v400, 0.0
        %v403 = vrot.slane %v402, 4
        %v404 = vadd.f32 %v402, %v403
        %v405 = vrot.slane %v404, 2
        %v406 = vadd.f32 %v404, %v405
        %v407 = vrot.slane %v406, 1
        %v408 = vadd.f32 %v406, %v407
        %v409 = vsel %vm313, %v401, 0.0
        %v410 = vrot.slane %v409, 4
        %v411 = vadd.f32 %v409, %v410
        %v412 = vrot.slane %v411, 2
        %v413 = vadd.f32 %v411, %v412
        %v414 = vrot.slane %v413, 1
        %v415 = vadd.f32 %v413, %v414
        %v416 = vmul.f32 %v386, 1.442695
        %v417 = vpow.pop %v416
        %v418 = vmul.f32 %v393, 1.442695
        %v419 = vpow.pop %v418
        %v420 = vmul.f32 %v386, %v408
        %v421 = vmul.f32 %v393, %v415
        %v422 = vsub.f32 1.0, %v417
        %v423 = vsub.f32 1.0, %v419
        %v424 = vmul.f32 %v422, %v422
        %v425 = vmul.f32 %v423, %v423
        %v426 = vmul.f32 %v424, %v420
        %v427 = vmul.f32 %v425, %v421
        %v428 = vsub.f32 0.0, %v426
        %v429 = vsub.f32 0.0, %v427
        %v430 = vld [vmem:[%s259] sm:$0x3]
        %v433 = vrot.slane %v429, 7
        %v434 = vsel %vm302, %v428, %v433
        %v436 = vsel %vm305, %v434, 0.0
        %v437 = vadd.f32 %v430, %v436
        %v438 = vlaneseq
        %vm439 = vcmp.ge.s32.totalorder %v438, 0
        %vm440 = vcmp.lt.s32.totalorder %v438, 256
        %vm441 = vmand %vm439, %vm440
        %442 = vst.msk [vmem:[%s259] sm:$0x3] %vm441, %v437
        %v443 = vld [vmem:[%s266] sm:$0x3]
        %v444 = vsel %vm305, 1, 0
        %v445 = vcvt.s32.f32 %v444
        %v446 = vadd.f32 %v443, %v445
        %447 = vst.msk [vmem:[%s266] sm:$0x3] %vm441, %v446
        %s448 = sand.u32 %s122, 1
        %s449 = scalar_lea.sflag [#allocation4], %s448
        %s450 = sand.u32 %s122, 1
        %s451 = smul.addr %s450, 2
        %s452 = scalar_lea.vmem [#allocation5], %s451
        %s453 = sand.u32 %s148, 1
        %s454 = scalar_lea.sflag [#allocation7], %s453
        %s455 = sand.u32 %s148, 1
        %s456 = smul.addr %s455, 2
        %s457 = scalar_lea.vmem [#allocation6], %s456
        // Predicated region
        $region41: #{tpu_custom_call.1} parent=31 // pred_check
          %p458 = pneg %p132
        $region42: #{tpu_custom_call.1} parent=31 // pred_check_branch
          %460 = sbr.rel (%p458) target = $region44
        $region43: #{tpu_custom_call.1} parent=31 // pred_region
          %462 = vsyncadd %s449, 0
          %s463 = smul.addr %s29, 2
          %s464 = scalar_lea.hbm %s3, %s463
          %s466 = sshll.u32 %s452, 4
          %s467 = int_to_ptr.vmem [resolvable:$true] %s466
          %s468 = sshll.u32 %s464, 4
          %s469 = int_to_ptr.hbm [resolvable:$true] %s468
          %471 = dma.vmem_to_hbm [thread:$0]  %s467, 32, %s469, %s449
        $region44: #{tpu_custom_call.1} parent=31 // pred_fallthru
          _
        // Predicated region
        $region45: #{tpu_custom_call.1} parent=31 // pred_check
          %p472 = pneg %p158
        $region46: #{tpu_custom_call.1} parent=31 // pred_check_branch
          %474 = sbr.rel (%p472) target = $region48
        $region47: #{tpu_custom_call.1} parent=31 // pred_region
          %476 = vsyncadd %s454, 0
          %s477 = smul.addr %s29, 2
          %s478 = scalar_lea.hbm %s4, %s477
          %s480 = sshll.u32 %s457, 4
          %s481 = int_to_ptr.vmem [resolvable:$true] %s480
          %s482 = sshll.u32 %s478, 4
          %s483 = int_to_ptr.hbm [resolvable:$true] %s482
          %485 = dma.vmem_to_hbm [thread:$0]  %s481, 32, %s483, %s454
        $region48: #{tpu_custom_call.1} parent=31 // pred_fallthru
          _
      $region32: #{tpu_custom_call.1} parent=5 // pred_fallthru
        _
      %p486 = scmp.le.s32.totalorder 2, %s20
      // Predicated region
      $region49: #{tpu_custom_call.1} parent=5 // pred_check
        %p487 = pneg %p486
      $region50: #{tpu_custom_call.1} parent=5 // pred_check_branch
        %489 = sbr.rel (%p487) target = $region52
      $region51: #{tpu_custom_call.1} parent=5 // pred_region
        %s490 = ssub.s32 %s20, 2
        // Predicated region
        $region53: #{tpu_custom_call.1} parent=51 // pred_check
          %p491 = pneg %p138
        $region54: #{tpu_custom_call.1} parent=51 // pred_check_branch
          %493 = sbr.rel (%p491) target = $region56
        $region55: #{tpu_custom_call.1} parent=51 // pred_region
          %s494 = sand.u32 %s123, 1
          %s495 = scalar_lea.sflag [#allocation4], %s494
          %s496 = sand.u32 %s123, 1
          %s497 = smul.addr %s496, 2
          %s498 = scalar_lea.vmem [#allocation5], %s497
          %500 = dma.done %s495, 32
        $region56: #{tpu_custom_call.1} parent=51 // pred_fallthru
          _
        // Predicated region
        $region57: #{tpu_custom_call.1} parent=51 // pred_check
          %p501 = pneg %p164
        $region58: #{tpu_custom_call.1} parent=51 // pred_check_branch
          %503 = sbr.rel (%p501) target = $region60
        $region59: #{tpu_custom_call.1} parent=51 // pred_region
          %s504 = sand.u32 %s149, 1
          %s505 = scalar_lea.sflag [#allocation7], %s504
          %s506 = sand.u32 %s149, 1
          %s507 = smul.addr %s506, 2
          %s508 = scalar_lea.vmem [#allocation6], %s507
          %510 = dma.done %s505, 32
        $region60: #{tpu_custom_call.1} parent=51 // pred_fallthru
          _
      $region52: #{tpu_custom_call.1} parent=5 // pred_fallthru
        _
    $region6: #{tpu_custom_call.1} parent=1 // loop_footer
      %s24 = sadd.s32 1, %s20
    $region7: #{tpu_custom_call.1} parent=1 // loop_footer_branch
      %19 = sbr.rel target = $region3
    $region8: #{tpu_custom_call.1} parent=1 // loop_exit
      _
    %511 = vsyncpa [#allocation3], 1
    %s512 = scalar_lea.sflag [#allocation3], 1
    %513 = vsyncpa %s512, 1
    %514 = vsyncpa [#allocation4], 1
    %s515 = scalar_lea.sflag [#allocation4], 1
    %516 = vsyncpa %s515, 1
    %517 = vsyncpa [#allocation7], 1
    %s518 = scalar_lea.sflag [#allocation7], 1
    %519 = vsyncpa %s518, 1

</llo_original>
